<compile_context>
chip_gen: v5e
topology: v5e:2x2
jax: 0.10.0
libtpu: 0.0.40
codegen_flags: <defaults>
</compile_context>

<pallas_src>
import functools

import jax
import jax.numpy as jnp
from jax.experimental import pallas as pl
from jax.experimental.pallas import tpu as pltpu


def _round_up(x, m):
    return ((x + m - 1) // m) * m


def _cdiv(a, b):
    return (a + b - 1) // b


def _vmem_capacity_bytes():
    """Best-effort per-core VMEM capacity query with conservative fallback."""
    try:
        return int(pltpu.get_tpu_info().vmem_capacity_bytes)
    except Exception:
        pass
    try:
        kind = jax.devices()[0].device_kind.lower()
        if "v5" in kind or "v6" in kind:
            return 128 * 1024 * 1024
        if "v7" in kind:
            return 64 * 1024 * 1024
    except Exception:
        pass
    return 64 * 1024 * 1024  # conservative default


def _vmem_budget_and_limit():
    cap = _vmem_capacity_bytes()
    if cap >= (96 << 20):
        # v5e / v6e: 128 MiB VMEM -> use most of it (lets W stay resident for large D).
        return 96 << 20, 112 << 20
    # v7x (64 MiB/TC) or unknown: stay conservative, leave headroom for internal scratch.
    return 40 << 20, 48 << 20


_VMEM_BUDGET, _VMEM_LIMIT = _vmem_budget_and_limit()


def _vmem_need(tm, tk, f_pad):
    """Kernel VMEM footprint for a (tm, tk) row/reduction tile (no accumulator scratch)."""
    return (2 * tm * tk * 4          # double-buffered f32 x tiles
            + 2 * tm * f_pad * 4     # double-buffered f32 out tiles
            + 2 * tk * f_pad * 2     # double-buffered bf16 W tiles
            + 2 * f_pad * 4)         # bias


def _choose_k_tile(d, f_pad):
    """Pick the reduction tile.  Prefer tk == d (W fully resident, single K block)."""
    if _vmem_need(128, d, f_pad) <= _VMEM_BUDGET:
        return d, d
    # W too big to keep resident: split K into 256-aligned chunks.
    tk = 2048
    while tk > 256 and _vmem_need(128, tk, f_pad) > _VMEM_BUDGET:
        tk //= 2
    tk = max(tk, 256)
    return tk, _round_up(d, tk)


def _pick_tm(rows, tk, f_pad):
    """Row tile: largest multiple-of-16 <= 1024 fitting the VMEM budget."""
    tm = 1024
    while tm > 16 and _vmem_need(tm, tk, f_pad) > _VMEM_BUDGET:
        tm //= 2
    tm = max(tm, 16)
    if rows <= tm:
        tm = max(16, _round_up(rows, 16))
        if rows >= 32:
            # Expose >= 2 row tiles so the "parallel" axis can split across v7x's 2 TCs.
            tm = max(16, _round_up(_cdiv(rows, 2), 16))
    return tm


# ----------------------------------------------------------------------------- kernels
def ridge_kernel_single(x_ref, w_ref, b_ref, o_ref):
    # Single K block: one fused dot + bias, no accumulator phasing.
    x = x_ref[...].astype(jnp.bfloat16)          # f32 -> bf16 on the VPU, hides under DMA
    o_ref[...] = jnp.dot(x, w_ref[...], preferred_element_type=jnp.float32) + b_ref[...]


def ridge_kernel_ksplit(x_ref, w_ref, b_ref, o_ref):
    # o_ref is resident across the K axis (its index_map ignores k): it is the accumulator.
    k = pl.program_id(1)

    @pl.when(k == 0)
    def _():
        o_ref[...] = jnp.broadcast_to(b_ref[...], o_ref.shape)   # bias added exactly once

    x = x_ref[...].astype(jnp.bfloat16)
    o_ref[...] += jnp.dot(x, w_ref[...], preferred_element_type=jnp.float32)


# ----------------------------------------------------------------------------- wrapper
@jax.jit
def _ridge_pallas(x2d, w_t, b_row):
    rows, d = x2d.shape
    d_pad, f_pad = w_t.shape

    if d_pad != d:
        # Required for correctness of the K-axis accumulation (zero K padding of x);
        # W was padded once at prepare time, never per call.
        x2d = jnp.pad(x2d, ((0, 0), (0, d_pad - d)))

    tk, _ = _choose_k_tile(d_pad, f_pad)         # same policy as prepare -> tk | d_pad
    assert d_pad % tk == 0
    nk = d_pad // tk
    tm = _pick_tm(rows, tk, f_pad)
    grid_rows = _cdiv(rows, tm)                  # cdiv grid: no per-call row padding

    flops = 2 * rows * d_pad * f_pad
    bytes_accessed = (rows * d_pad * 4 + d_pad * f_pad * 2 + f_pad * 4
                      + rows * f_pad * 4)
    cost = pl.CostEstimate(flops=flops, transcendentals=0, bytes_accessed=bytes_accessed)

    if nk == 1:
        return pl.pallas_call(
            ridge_kernel_single,
            out_shape=jax.ShapeDtypeStruct((rows, f_pad), jnp.float32),
            grid_spec=pltpu.PrefetchScalarGridSpec(
                num_scalar_prefetch=0,
                grid=(grid_rows,),
                in_specs=[
                    pl.BlockSpec((tm, d_pad), lambda i: (i, 0)),        # x rows stream
                    pl.BlockSpec((d_pad, f_pad), lambda i: (0, 0)),     # W resident
                    pl.BlockSpec((1, f_pad), lambda i: (0, 0)),         # bias
                ],
                out_specs=pl.BlockSpec((tm, f_pad), lambda i: (i, 0)),
            ),
            compiler_params=pltpu.CompilerParams(
                dimension_semantics=("parallel",),
                vmem_limit_bytes=_VMEM_LIMIT,
            ),
            cost_estimate=cost,
        )(x2d, w_t, b_row)

    return pl.pallas_call(
        ridge_kernel_ksplit,
        out_shape=jax.ShapeDtypeStruct((rows, f_pad), jnp.float32),
        grid_spec=pltpu.PrefetchScalarGridSpec(
            num_scalar_prefetch=0,
            grid=(grid_rows, nk),
            in_specs=[
                pl.BlockSpec((tm, tk), lambda i, k: (i, k)),            # x rows stream
                pl.BlockSpec((tk, f_pad), lambda i, k: (k, 0)),         # W K-chunks
                pl.BlockSpec((1, f_pad), lambda i, k: (0, 0)),          # bias
            ],
            out_specs=pl.BlockSpec((tm, f_pad), lambda i, k: (i, 0)),   # resident over K
        ),
        compiler_params=pltpu.CompilerParams(
            dimension_semantics=("parallel", "arbitrary"),
            vmem_limit_bytes=_VMEM_LIMIT,
        ),
        cost_estimate=cost,
    )(x2d, w_t, b_row)


def prepare_subject_params(W, b):
    """One-time prep: transpose to [D, F], pad F to 128 (lane-dense), pad D if the
    reduction axis will be split, cast W to bf16.  No per-call padding of W."""
    f, d = W.shape
    f_pad = _round_up(f, 128)
    _, d_pad = _choose_k_tile(d, f_pad)
    w_t = jnp.zeros((d_pad, f_pad), jnp.bfloat16)
    w_t = w_t.at[:d, :f].set(jnp.transpose(W).astype(jnp.bfloat16))
    b_row = jnp.zeros((1, f_pad), jnp.float32).at[0, :f].set(b.astype(jnp.float32))
    return w_t, b_row, f


def ridge_regression_forward(x, prepared_params, subj_idx):
    """x: [B, S, D_subj] f32; prepared_params[i] = (W_T[Dpad,Fpad] bf16, b[1,Fpad] f32, F)."""
    w_t, b_row, f = prepared_params[subj_idx]
    B, S, D = x.shape
    x2d = x.reshape(B * S, D)                    # keep f32; bf16 cast happens in-kernel
    out = _ridge_pallas(x2d, w_t, b_row)         # [B*S, Fpad] f32
    return out[:, :f].reshape(B, S, f)


def init_params(key, input_sizes, out_features):
    """Deterministic init mimicking torch.nn.Linear default (uniform +-1/sqrt(fan_in))."""
    weights, biases = [], []
    for d in input_sizes:
        key, kw, kb = jax.random.split(key, 3)
        bound = 1.0 / (d ** 0.5)
        weights.append(
            jax.random.uniform(kw, (out_features, d), jnp.float32, -bound, bound))
        biases.append(
            jax.random.uniform(kb, (out_features,), jnp.float32, -bound, bound))
    return weights, biases


if __name__ == "__main__":
    # Small shapes consistent with the module: seq_len = seq_past + 1 + seq_future
    batch = 2
    seq_past, seq_future = 3, 4
    seq_len = seq_past + 1 + seq_future          # 8
    input_sizes = [32, 32]                       # one Linear per subject
    out_features = 16
    subj_idx = 1

    key = jax.random.PRNGKey(0)
    weights, biases = init_params(key, input_sizes, out_features)
    # Pre-transposed / padded / bf16-cast params (done once, not per forward).
    prepared = [prepare_subject_params(w, b) for w, b in zip(weights, biases)]

    key, kx = jax.random.split(key)
    x = jax.random.normal(kx, (batch, seq_len, input_sizes[subj_idx]), jnp.float32)

    out = ridge_regression_forward(x, prepared, subj_idx)
    out = jax.block_until_ready(out)

    # Pure-JAX f32 reference (same semantics as the PyTorch forward).
    ref = jnp.einsum("bsd,fd->bsf", x, weights[subj_idx]) + biases[subj_idx]
    assert out.shape == (batch, seq_len, out_features)
    # bf16 matmul operands with f32 accumulation -> relaxed tolerance vs f32 reference.
    err = float(jnp.max(jnp.abs(out - ref)))
    assert jnp.allclose(out, ref, atol=1e-1, rtol=2e-2), err

    print("KERNEL_OK")
</pallas_src>

<mosaic_0001>
module attributes {stable_mosaic.version = 11 : i64} {
  func.func @ridge_kernel_single(%arg0: i32, %arg1: memref<16x32xf32, #tpu.memory_space<vmem>>, %arg2: memref<32x128xbf16, #tpu.memory_space<vmem>>, %arg3: memref<1x128xf32, #tpu.memory_space<vmem>>, %arg4: memref<16x128xf32, #tpu.memory_space<vmem>>) attributes {dimension_semantics = [#tpu.dimension_semantics<parallel>], iteration_bounds = array<i64: 1>, scalar_prefetch = 0 : i64, scratch_operands = 0 : i64, tpu.core_type = #tpu.core_type<tc>, window_params = [{transform_indices = @transform_0, window_bounds = array<i64: 16, 32>}, {pipeline_mode = #tpu.pipeline_mode<synchronous>, transform_indices = @transform_1, window_bounds = array<i64: 32, 128>}, {pipeline_mode = #tpu.pipeline_mode<synchronous>, transform_indices = @transform_2, window_bounds = array<i64: 1, 128>}, {transform_indices = @transform_3, window_bounds = array<i64: 16, 128>}]} {
    %c0 = arith.constant 0 : index
    %c0_0 = arith.constant 0 : index
    %0 = vector.load %arg1[%c0, %c0_0] : memref<16x32xf32, #tpu.memory_space<vmem>>, vector<16x32xf32>
    %1 = arith.truncf %0 : vector<16x32xf32> to vector<16x32xbf16>
    %c0_1 = arith.constant 0 : index
    %c0_2 = arith.constant 0 : index
    %2 = vector.load %arg2[%c0_1, %c0_2] : memref<32x128xbf16, #tpu.memory_space<vmem>>, vector<32x128xbf16>
    %cst = arith.constant dense<0.000000e+00> : vector<16x128xf32>
    %3 = tpu.matmul %1, %2, %cst {dimension_numbers = #tpu.dot_dimension_numbers<[1], [0], [0], [1], [0, 0, 1, 1], [], []>} : vector<16x32xbf16>, vector<32x128xbf16>, vector<16x128xf32> -> vector<16x128xf32>
    %c0_3 = arith.constant 0 : index
    %c0_4 = arith.constant 0 : index
    %4 = vector.load %arg3[%c0_3, %c0_4] : memref<1x128xf32, #tpu.memory_space<vmem>>, vector<1x128xf32>
    %5 = vector.broadcast %4 : vector<1x128xf32> to vector<16x128xf32>
    %6 = arith.addf %3, %5 : vector<16x128xf32>
    %c0_5 = arith.constant 0 : index
    %c0_6 = arith.constant 0 : index
    %7 = vector.load %arg4[%c0_5, %c0_6] : memref<16x128xf32, #tpu.memory_space<vmem>>, vector<16x128xf32>
    tpu.vector_store %arg4[%c0_5, %c0_6], %6 {strides = array<i32>} : memref<16x128xf32, #tpu.memory_space<vmem>>, vector<16x128xf32>,
    return
  }
  func.func @transform_0(%arg0: i32) -> (i32, i32) {
    %c0_i32 = arith.constant 0 : i32
    %c0_i32_0 = arith.constant 0 : i32
    return %arg0, %c0_i32 : i32, i32
  }
  func.func @transform_1(%arg0: i32) -> (i32, i32) {
    %c0_i32 = arith.constant 0 : i32
    %c0_i32_0 = arith.constant 0 : i32
    %c0_i32_1 = arith.constant 0 : i32
    return %c0_i32, %c0_i32_0 : i32, i32
  }
  func.func @transform_2(%arg0: i32) -> (i32, i32) {
    %c0_i32 = arith.constant 0 : i32
    %c0_i32_0 = arith.constant 0 : i32
    %c0_i32_1 = arith.constant 0 : i32
    return %c0_i32, %c0_i32_0 : i32, i32
  }
  func.func @transform_3(%arg0: i32) -> (i32, i32) {
    %c0_i32 = arith.constant 0 : i32
    %c0_i32_0 = arith.constant 0 : i32
    return %arg0, %c0_i32 : i32, i32
  }
}

</mosaic_0001>

<llo_original>
// kernel: _ridge_pallas.1
$region0: #{_ridge_pallas.1}
  #allocation0 [shape = 'u32[]', space=smem, size = 0x4, offset = 0x4, fixed_abs, tag = 'smem constant byte address 0x4 - core index']
  #allocation1 [shape = 'u32[72,128]{1,0:T(1,128)}', space=vmem, size = 0x9000, scoped, tag = 'internal scratch']
  %s0 = inlined_call_operand.hbm [shape: f32[16,32], index: 0, kind: input, shape index: {}]
  %s1 = inlined_call_operand.hbm [shape: bf16[32,128], index: 1, kind: input, shape index: {}]
  %s2 = inlined_call_operand.vmem [shape: f32[1,128], index: 2, kind: input, shape index: {}]
  %s3 = inlined_call_operand.hbm [shape: f32[16,128], index: 3, kind: output, shape index: {}]
  %s4 = sld [smem:[#allocation0]]
  $region30: #{_ridge_pallas.1} parent=0
    _
  %s6 = ssub.s32 1, %s4
  %s7 = scalar_select 0, %s6, %s4
  $region1: #{_ridge_pallas.1} parent=0
    #allocation2 [shape = 'u8[8192]{0}', space=vmem, size = 0x2000, scoped, tag = 'input window, operand 0, single buffered']
    #allocation3 [shape = 's32[1]{0}', space=sflag, size = 0x4, scoped, tag = 'scoped memory for _ridge_pallas.1']
    #allocation4 [shape = 's32[1]{0}', space=sflag, size = 0x4, scoped, tag = 'scoped memory for _ridge_pallas.1']
    #allocation5 [shape = 'u8[8192]{0}', space=vmem, size = 0x2000, scoped, tag = 'input window, operand 1, single buffered']
    #allocation6 [shape = 's32[1]{0}', space=sflag, size = 0x4, scoped, tag = 'scoped memory for _ridge_pallas.1']
    #allocation7 [shape = 'u8[8192]{0}', space=vmem, size = 0x2000, scoped, tag = 'output window, operand 0, single buffered']
    %8 = vsyncpa [#allocation3], 0
    %9 = vsyncpa [#allocation6], 0
    %10 = vsyncpa [#allocation4], 0
    // Predicated region
    $region2: #{_ridge_pallas.1} parent=1 // pred_check
      _
    $region3: #{_ridge_pallas.1} parent=1 // pred_check_branch
      %12 = sbr.rel (0) target = $region5
    $region4: #{_ridge_pallas.1} parent=1 // pred_region
      %14 = vsyncadd [#allocation3], 0
      %s15 = sshll.u32 %s0, 4
      %s16 = int_to_ptr.hbm [resolvable:$true] %s15
      %s17 = sshll.u32 [#allocation2], 4
      %s18 = int_to_ptr.vmem [resolvable:$true] %s17
      %23 = dma.hbm_to_vmem [thread:$0]  %s16, 256, %s18, [#allocation3], 128, 128, 8
    $region5: #{_ridge_pallas.1} parent=1 // pred_fallthru
      _
    // Predicated region
    $region6: #{_ridge_pallas.1} parent=1 // pred_check
      _
    $region7: #{_ridge_pallas.1} parent=1 // pred_check_branch
      %25 = sbr.rel (0) target = $region9
    $region8: #{_ridge_pallas.1} parent=1 // pred_region
      %27 = vsyncadd [#allocation6], 0
      %s28 = sshll.u32 %s1, 4
      %s29 = int_to_ptr.hbm [resolvable:$true] %s28
      %s30 = sshll.u32 [#allocation5], 4
      %s31 = int_to_ptr.vmem [resolvable:$true] %s30
      %36 = dma.hbm_to_vmem [thread:$0]  %s29, 256, %s31, [#allocation6], 64, 64, 4
    $region9: #{_ridge_pallas.1} parent=1 // pred_fallthru
      _
    // Predicated region
    $region10: #{_ridge_pallas.1} parent=1 // pred_check
      _
    $region11: #{_ridge_pallas.1} parent=1 // pred_check_branch
      %38 = sbr.rel (0) target = $region13
    $region12: #{_ridge_pallas.1} parent=1 // pred_region
      _
    $region13: #{_ridge_pallas.1} parent=1 // pred_fallthru
      _
    // Predicated region
    $region14: #{_ridge_pallas.1} parent=1 // pred_check
      _
    $region15: #{_ridge_pallas.1} parent=1 // pred_check_branch
      %40 = sbr.rel (0) target = $region17
    $region16: #{_ridge_pallas.1} parent=1 // pred_region
      %42 = dma.done [#allocation3], 256
    $region17: #{_ridge_pallas.1} parent=1 // pred_fallthru
      _
    // Predicated region
    $region18: #{_ridge_pallas.1} parent=1 // pred_check
      _
    $region19: #{_ridge_pallas.1} parent=1 // pred_check_branch
      %44 = sbr.rel (0) target = $region21
    $region20: #{_ridge_pallas.1} parent=1 // pred_region
      %46 = dma.done [#allocation6], 256
    $region21: #{_ridge_pallas.1} parent=1 // pred_fallthru
      _
    %v48 = vld [vmem:[#allocation2] sm:$0xff]
    %v49 = vld [vmem:[#allocation2 + $0x8] sm:$0xff]
    %v50 = vpack.c.bf16 %v49, %v48
    %v51 = vld [vmem:[#allocation5] sm:$0xf]
    %v52 = vld [vmem:[#allocation5 + $0x4] sm:$0xf]
    %v53 = vld [vmem:[#allocation5 + $0x8] sm:$0xf]
    %v54 = vld [vmem:[#allocation5 + $0xc] sm:$0xf]
    %v55 = vld [vmem:[%s2] sm:$0x1]
    %v57 = vperm.slane %v55, 0
    %v63 = vunpack.c.l.b16 %v51
    %v64 = vunpack.c.l.b16 %v52
    %v65 = vunpack.c.l.b16 %v53
    %v66 = vunpack.c.l.b16 %v54
    %v67 = vpack.c.b16 %v64, %v63
    %v68 = vpack.c.b16 %v66, %v65
    %vm71 = vcmask 261120
    %v73 = vsel %vm71, %v50, 0
    %75 = vmatpush.bf16.msra.mxu0 0
    %76 = vmatpush.bf16.msra.mxu0 0
    %77 = vmatpush.bf16.msra.mxu0 0
    %78 = vmatpush.bf16.msra.mxu0 0
    %79 = vmatpush.bf16.msra.mxu0 0
    %80 = vmatpush.bf16.msra.mxu0 0
    %81 = vmatpush.bf16.msra.mxu0 %v68
    %82 = vmatpush.bf16.msra.mxu0 %v67
    %83 = vmatmul.bf16.gmra.mxu0 %v73
    %v84 = vpop.f32.mrf.mxu0
    %v85 = vadd.f32 %v57, %v84
    %v86 = vpop.f32.mrf.mxu0
    %v87 = vadd.f32 %v57, %v86
    %88 = vdwg.mxu0
    %89 = vst [vmem:[#allocation7] sm:$0xff] %v85
    %90 = vst [vmem:[#allocation7 + $0x8] sm:$0xff] %v87
    // Predicated region
    $region22: #{_ridge_pallas.1} parent=1 // pred_check
      _
    $region23: #{_ridge_pallas.1} parent=1 // pred_check_branch
      %92 = sbr.rel (0) target = $region25
    $region24: #{_ridge_pallas.1} parent=1 // pred_region
      %94 = vsyncadd [#allocation4], 0
      %s95 = sshll.u32 [#allocation7], 4
      %s96 = int_to_ptr.vmem [resolvable:$true] %s95
      %s97 = sshll.u32 %s3, 4
      %s98 = int_to_ptr.hbm [resolvable:$true] %s97
      %103 = dma.vmem_to_hbm [thread:$0]  %s96, 256, %s98, [#allocation4], 128, 128, 8
    $region25: #{_ridge_pallas.1} parent=1 // pred_fallthru
      _
    // Predicated region
    $region26: #{_ridge_pallas.1} parent=1 // pred_check
      _
    $region27: #{_ridge_pallas.1} parent=1 // pred_check_branch
      %105 = sbr.rel (0) target = $region29
    $region28: #{_ridge_pallas.1} parent=1 // pred_region
      %107 = dma.done [#allocation4], 256
    $region29: #{_ridge_pallas.1} parent=1 // pred_fallthru
      _
    %108 = vsyncpa [#allocation3], 1
    %109 = vsyncpa [#allocation6], 1
    %110 = vsyncpa [#allocation4], 1

</llo_original>
